<compile_context>
chip_gen: v7x
topology: tpu7x:2x2x1
jax: 0.10.0
libtpu: 0.0.40
codegen_flags: <defaults>
</compile_context>

<pallas_src>
import jax
import jax.numpy as jnp
from jax.experimental import pallas as pl
from jax.experimental.pallas import tpu as pltpu

# ----- model hyperparameters (from the PyTorch module) -----
VOCAB_SIZE = 81
EMBEDDING_DIM = 64
HIDDEN_SIZE = 32
NUM_LAYERS = 1          # single-layer LSTM (recurrence written for 1 layer)
DROPOUT_PROB = 0.2      # identity at inference time
VOCAB_PAD = 128         # lane-dense padding for vocab-sized dims (one-hot & logits)
BATCH_PAD = 8           # sublane padding of the batch dim (unmasked vst, aligned slices)


def lstm_fc_kernel(ids_ref, proj_tab_ref, w_ref, bias_ref, out_ref):
    """Fused embedding-gather + input-projection + LSTM recurrence + final Linear.

    ids_ref      : (S*Bp, 1)        int32  time-major token ids (row t*Bp + b; pad rows = 0)
    proj_tab_ref : (VOCAB_PAD, 4H)  bf16   emb @ W_ih^T, g-columns pre-scaled by 2
    w_ref        : (H, 4H+VOCAB_PAD) bf16  [:, :4H]=W_hh^T (g-cols x2), [:, 4H:]=W_fc^T padded
    bias_ref     : (2, 128)         f32    row 0: b_ih+b_hh (g-cols x2), row 1: b_fc padded
    out_ref      : (Bp, VOCAB_PAD)  f32    padded logits
    """
    SBp = ids_ref.shape[0]
    Bp = out_ref.shape[0]
    S = SBp // Bp                        # static (trace-time) ints
    H4 = proj_tab_ref.shape[1]           # 4H = 128
    H = H4 // 4
    Vp = out_ref.shape[1]

    whh = w_ref[:, :H4]                  # (H, 4H)  bf16   lane-tile-aligned static slices
    wfc = w_ref[:, H4:]                  # (H, Vp)  bf16
    b_gates = bias_ref[0:1, :H4]         # (1, 4H)  f32
    b_fc = bias_ref[1:2, :Vp]            # (1, Vp)  f32

    # --- Fused embedding gather + input projection: one bf16 MXU matmul over the vocab-
    # padded table; the folded gate bias is added once, full-width, off the recurrence path.
    ids = ids_ref[...]                                                   # (S*Bp, 1) i32
    iota = jax.lax.broadcasted_iota(jnp.int32, (SBp, Vp), 1)
    one_hot = (ids == iota).astype(jnp.bfloat16)                         # (S*Bp, Vp) bf16
    x_proj = jnp.dot(one_hot, proj_tab_ref[...],
                     preferred_element_type=jnp.float32) + b_gates       # (S*Bp, 4H) f32

    # --- Recurrence: fully unrolled over the static sequence length. ---
    # TODO(synk): if the bundle dump shows W_hh re-pushed into the MXU for each unrolled
    #             step, latch it once via pltpu.matmul_push_rhs / matmul_acc_lhs / matmul_pop.
    h = jnp.zeros((Bp, H), jnp.float32)
    c = jnp.zeros((Bp, H), jnp.float32)
    for t in range(S):                                                   # static unroll
        # Sublane-aligned (Bp=8) static slice: picks whole vregs, no in-vreg row extraction.
        x_t = x_proj[t * Bp:(t + 1) * Bp, :]
        gates = x_t + jnp.dot(h.astype(jnp.bfloat16), whh,
                              preferred_element_type=jnp.float32)        # (Bp, 4H) f32
        # Single full-width sigmoid pass (EUP).  tanh(g_pre) = 2*sigmoid(2*g_pre) - 1, with
        # the 2x already folded into proj_tab / whh / gate-bias g-columns at prep time.
        sig = jax.nn.sigmoid(gates)
        i_g = sig[:, 0 * H:1 * H]
        f_g = sig[:, 1 * H:2 * H]
        sg = sig[:, 2 * H:3 * H]          # sigmoid(2 * g_pre)
        o_g = sig[:, 3 * H:4 * H]
        g_g = 2.0 * sg - 1.0              # = tanh(g_pre), one VPU fma instead of an EUP pass
        c = f_g * c + i_g * g_g
        h = o_g * jnp.tanh(c)             # second (and last) EUP pass of the step
        # TODO(synk): on v6e/v7x (bf16 VALU/EUP) h could stay bf16 end-to-end to drop the
        #             per-step cast; kept f32 elementwise so the same kernel is right on v5e.

    # Dropout on out[:, -1, :] is identity at inference (eval mode).
    # TODO(synk): training-mode dropout (p=0.2) not implemented in-kernel.
    out_ref[...] = (
        jnp.dot(h.astype(jnp.bfloat16), wfc, preferred_element_type=jnp.float32) + b_fc
    )


def prepare_params(params):
    """One-time parameter fusion/padding/casting (hoisted out of the per-call forward)."""
    H = HIDDEN_SIZE
    H4 = 4 * H
    # PyTorch LSTM gate order is [i, f, g, o]; scale the g block by 2 so the kernel can use
    # tanh(x) = 2*sigmoid(2x) - 1 with a single full-width sigmoid pass.
    gscale = jnp.ones((H4,), jnp.float32).at[2 * H:3 * H].set(2.0)

    proj = (params["embedding"] @ params["w_ih"].T) * gscale[None, :]        # (V, 4H) f32
    proj = jnp.pad(proj, ((0, VOCAB_PAD - VOCAB_SIZE), (0, 0)))              # (128, 4H)
    proj_bf = proj.astype(jnp.bfloat16)

    whh = (params["w_hh"].T * gscale[None, :]).astype(jnp.bfloat16)          # (H, 4H) bf16
    wfc = jnp.pad(params["w_fc"].T,
                  ((0, 0), (0, VOCAB_PAD - VOCAB_SIZE))).astype(jnp.bfloat16)  # (H, 128)
    w_comb = jnp.concatenate([whh, wfc], axis=1)                             # (H, 4H+128)

    b_gates = (params["b_ih"] + params["b_hh"]) * gscale                     # (4H,)
    b_fc = jnp.pad(params["b_fc"], (0, VOCAB_PAD - VOCAB_SIZE))              # (128,)
    width = max(H4, VOCAB_PAD)
    biases = jnp.stack([jnp.pad(b_gates, (0, width - H4)),
                        jnp.pad(b_fc, (0, width - VOCAB_PAD))], axis=0)      # (2, 128) f32

    return {"proj_tab": proj_bf, "w": w_comb, "biases": biases}


def lstm_baseline_forward(x_ids, prepped):
    """x_ids: (B, S) int32 token indices (B <= 8). Returns logits (B, VOCAB_SIZE) f32."""
    B, S = x_ids.shape
    Bp = BATCH_PAD

    # Time-major ids, batch padded to 8 sublanes: row t*Bp + b (pad rows hold id 0;
    # their h/c/logit rows are computed but discarded by the wrapper slice).
    ids_p = jnp.zeros((S, Bp), jnp.int32).at[:, :B].set(x_ids.T.astype(jnp.int32))
    ids_tm = ids_p.reshape(S * Bp, 1)

    # TODO(synk): if B scales beyond toy size, add a batch grid axis with
    #   dimension_semantics=("parallel",) so v7x's two TensorCores both run; if S scales,
    #   tile x_proj over S ("arbitrary" axis) to stay under v7x's 64 MiB VMEM.
    vmem = pl.BlockSpec(memory_space=pltpu.MemorySpace.VMEM)
    out_pad = pl.pallas_call(
        lstm_fc_kernel,
        out_shape=jax.ShapeDtypeStruct((Bp, VOCAB_PAD), jnp.float32),
        in_specs=[vmem] * 4,
        out_specs=vmem,
    )(ids_tm, prepped["proj_tab"], prepped["w"], prepped["biases"])

    return out_pad[:B, :VOCAB_SIZE]


def init_params(key):
    """Deterministic parameter init matching the PyTorch module's shapes."""
    k = jax.random.split(key, 7)
    bound = 1.0 / jnp.sqrt(HIDDEN_SIZE)
    return {
        "embedding": jax.random.normal(k[0], (VOCAB_SIZE, EMBEDDING_DIM), jnp.float32),
        "w_ih": jax.random.uniform(k[1], (4 * HIDDEN_SIZE, EMBEDDING_DIM), jnp.float32,
                                   -bound, bound),
        "w_hh": jax.random.uniform(k[2], (4 * HIDDEN_SIZE, HIDDEN_SIZE), jnp.float32,
                                   -bound, bound),
        "b_ih": jax.random.uniform(k[3], (4 * HIDDEN_SIZE,), jnp.float32, -bound, bound),
        "b_hh": jax.random.uniform(k[4], (4 * HIDDEN_SIZE,), jnp.float32, -bound, bound),
        "w_fc": jax.random.uniform(k[5], (VOCAB_SIZE, HIDDEN_SIZE), jnp.float32,
                                   -bound, bound),
        "b_fc": jax.random.uniform(k[6], (VOCAB_SIZE,), jnp.float32, -bound, bound),
    }


def reference_forward(x_ids, params):
    """Pure-f32 JAX reference of the same forward pass (for correctness check)."""
    x = params["embedding"][x_ids]  # (B, S, E)
    B, S, _ = x.shape
    H = HIDDEN_SIZE
    w_ih, w_hh = params["w_ih"], params["w_hh"]
    b = params["b_ih"] + params["b_hh"]

    def step(carry, x_t):
        h, c = carry
        gates = x_t @ w_ih.T + h @ w_hh.T + b
        i = jax.nn.sigmoid(gates[:, 0 * H:1 * H])
        f = jax.nn.sigmoid(gates[:, 1 * H:2 * H])
        g = jnp.tanh(gates[:, 2 * H:3 * H])
        o = jax.nn.sigmoid(gates[:, 3 * H:4 * H])
        c = f * c + i * g
        h = o * jnp.tanh(c)
        return (h, c), None

    (h, _), _ = jax.lax.scan(step, (jnp.zeros((B, H)), jnp.zeros((B, H))),
                             jnp.transpose(x, (1, 0, 2)))
    return h @ params["w_fc"].T + params["b_fc"]


if __name__ == "__main__":
    key = jax.random.PRNGKey(0)
    batch, seq = 2, 8
    params = init_params(key)
    x_ids = jax.random.randint(jax.random.PRNGKey(1), (batch, seq), 0, VOCAB_SIZE,
                               dtype=jnp.int32)

    # One-time parameter prep (cached across calls); the jitted forward is prep-free.
    prepped = jax.block_until_ready(prepare_params(params))

    fwd = jax.jit(lstm_baseline_forward)
    logits = fwd(x_ids, prepped)
    jax.block_until_ready(logits)

    ref = reference_forward(x_ids, params)
    assert logits.shape == (batch, VOCAB_SIZE)
    # bf16 MXU operands (proj_tab / W_hh / W_fc / h) vs pure-f32 reference: |diff| ~ few e-3.
    max_diff = float(jnp.max(jnp.abs(logits - ref)))
    assert jnp.allclose(logits, ref, atol=3e-2, rtol=3e-2), max_diff
    print("KERNEL_OK")
</pallas_src>

<mosaic_0001>
module attributes {stable_mosaic.version = 11 : i64} {
  func.func @lstm_fc_kernel(%arg0: memref<64x1xi32, #tpu.memory_space<vmem>>, %arg1: memref<128x128xbf16, #tpu.memory_space<vmem>>, %arg2: memref<32x256xbf16, #tpu.memory_space<vmem>>, %arg3: memref<2x128xf32, #tpu.memory_space<vmem>>, %arg4: memref<8x128xf32, #tpu.memory_space<vmem>>) attributes {dimension_semantics = [], scalar_prefetch = 0 : i64, scratch_operands = 0 : i64, tpu.core_type = #tpu.core_type<tc>} {
    %c0 = arith.constant 0 : index
    %c0_0 = arith.constant 0 : index
    %0 = vector.load %arg2[%c0, %c0_0] : memref<32x256xbf16, #tpu.memory_space<vmem>>, vector<32x128xbf16>
    %c0_1 = arith.constant 0 : index
    %c128 = arith.constant 128 : index
    %1 = vector.load %arg2[%c0_1, %c128] : memref<32x256xbf16, #tpu.memory_space<vmem>>, vector<32x128xbf16>
    %c0_2 = arith.constant 0 : index
    %c0_3 = arith.constant 0 : index
    %2 = vector.load %arg3[%c0_2, %c0_3] : memref<2x128xf32, #tpu.memory_space<vmem>>, vector<1x128xf32>
    %c1 = arith.constant 1 : index
    %c0_4 = arith.constant 0 : index
    %3 = vector.load %arg3[%c1, %c0_4] : memref<2x128xf32, #tpu.memory_space<vmem>>, vector<1x128xf32>
    %c0_5 = arith.constant 0 : index
    %c0_6 = arith.constant 0 : index
    %4 = vector.load %arg0[%c0_5, %c0_6] : memref<64x1xi32, #tpu.memory_space<vmem>>, vector<64x1xi32>
    %5 = tpu.iota {dimensions = array<i32: 1>} : vector<64x128xi32>
    %6 = vector.broadcast %4 : vector<64x1xi32> to vector<64x128xi32>
    %7 = arith.cmpi eq, %6, %5 : vector<64x128xi32>
    %8 = arith.extui %7 : vector<64x128xi1> to vector<64x128xi32>
    %9 = arith.sitofp %8 : vector<64x128xi32> to vector<64x128xf32>
    %10 = arith.truncf %9 : vector<64x128xf32> to vector<64x128xbf16>
    %c0_7 = arith.constant 0 : index
    %c0_8 = arith.constant 0 : index
    %11 = vector.load %arg1[%c0_7, %c0_8] : memref<128x128xbf16, #tpu.memory_space<vmem>>, vector<128x128xbf16>
    %cst = arith.constant dense<0.000000e+00> : vector<64x128xf32>
    %12 = tpu.matmul %10, %11, %cst {dimension_numbers = #tpu.dot_dimension_numbers<[1], [0], [0], [1], [0, 0, 1, 1], [], []>} : vector<64x128xbf16>, vector<128x128xbf16>, vector<64x128xf32> -> vector<64x128xf32>
    %13 = vector.broadcast %2 : vector<1x128xf32> to vector<64x128xf32>
    %14 = arith.addf %12, %13 : vector<64x128xf32>
    %cst_9 = arith.constant 0.000000e+00 : f32
    %15 = vector.broadcast %cst_9 : f32 to vector<8x32xf32>
    %cst_10 = arith.constant 0.000000e+00 : f32
    %16 = vector.broadcast %cst_10 : f32 to vector<8x32xf32>
    %17 = vector.extract_strided_slice %14 {offsets = [0, 0], sizes = [8, 128], strides = [1, 1]} : vector<64x128xf32> to vector<8x128xf32>
    %18 = arith.truncf %15 : vector<8x32xf32> to vector<8x32xbf16>
    %cst_11 = arith.constant dense<0.000000e+00> : vector<8x128xf32>
    %19 = tpu.matmul %18, %0, %cst_11 {dimension_numbers = #tpu.dot_dimension_numbers<[1], [0], [0], [1], [0, 0, 1, 1], [], []>} : vector<8x32xbf16>, vector<32x128xbf16>, vector<8x128xf32> -> vector<8x128xf32>
    %20 = arith.addf %17, %19 : vector<8x128xf32>
    %21 = arith.negf %20 : vector<8x128xf32>
    %22 = math.exp %21 : vector<8x128xf32>
    %cst_12 = arith.constant 1.000000e+00 : f32
    %23 = vector.broadcast %cst_12 : f32 to vector<8x128xf32>
    %24 = arith.addf %23, %22 : vector<8x128xf32>
    %25 = arith.divf %23, %24 : vector<8x128xf32>
    %26 = vector.extract_strided_slice %25 {offsets = [0, 0], sizes = [8, 32], strides = [1, 1]} : vector<8x128xf32> to vector<8x32xf32>
    %27 = vector.extract_strided_slice %25 {offsets = [0, 32], sizes = [8, 32], strides = [1, 1]} : vector<8x128xf32> to vector<8x32xf32>
    %28 = vector.extract_strided_slice %25 {offsets = [0, 64], sizes = [8, 32], strides = [1, 1]} : vector<8x128xf32> to vector<8x32xf32>
    %29 = vector.extract_strided_slice %25 {offsets = [0, 96], sizes = [8, 32], strides = [1, 1]} : vector<8x128xf32> to vector<8x32xf32>
    %cst_13 = arith.constant 2.000000e+00 : f32
    %30 = vector.broadcast %cst_13 : f32 to vector<8x32xf32>
    %31 = arith.mulf %30, %28 : vector<8x32xf32>
    %cst_14 = arith.constant 1.000000e+00 : f32
    %32 = vector.broadcast %cst_14 : f32 to vector<8x32xf32>
    %33 = arith.subf %31, %32 : vector<8x32xf32>
    %34 = arith.mulf %27, %16 : vector<8x32xf32>
    %35 = arith.mulf %26, %33 : vector<8x32xf32>
    %36 = arith.addf %34, %35 : vector<8x32xf32>
    %37 = math.tanh %36 : vector<8x32xf32>
    %38 = arith.mulf %29, %37 : vector<8x32xf32>
    %39 = vector.extract_strided_slice %14 {offsets = [8, 0], sizes = [8, 128], strides = [1, 1]} : vector<64x128xf32> to vector<8x128xf32>
    %40 = arith.truncf %38 : vector<8x32xf32> to vector<8x32xbf16>
    %cst_15 = arith.constant dense<0.000000e+00> : vector<8x128xf32>
    %41 = tpu.matmul %40, %0, %cst_15 {dimension_numbers = #tpu.dot_dimension_numbers<[1], [0], [0], [1], [0, 0, 1, 1], [], []>} : vector<8x32xbf16>, vector<32x128xbf16>, vector<8x128xf32> -> vector<8x128xf32>
    %42 = arith.addf %39, %41 : vector<8x128xf32>
    %43 = arith.negf %42 : vector<8x128xf32>
    %44 = math.exp %43 : vector<8x128xf32>
    %cst_16 = arith.constant 1.000000e+00 : f32
    %45 = vector.broadcast %cst_16 : f32 to vector<8x128xf32>
    %46 = arith.addf %45, %44 : vector<8x128xf32>
    %47 = arith.divf %45, %46 : vector<8x128xf32>
    %48 = vector.extract_strided_slice %47 {offsets = [0, 0], sizes = [8, 32], strides = [1, 1]} : vector<8x128xf32> to vector<8x32xf32>
    %49 = vector.extract_strided_slice %47 {offsets = [0, 32], sizes = [8, 32], strides = [1, 1]} : vector<8x128xf32> to vector<8x32xf32>
    %50 = vector.extract_strided_slice %47 {offsets = [0, 64], sizes = [8, 32], strides = [1, 1]} : vector<8x128xf32> to vector<8x32xf32>
    %51 = vector.extract_strided_slice %47 {offsets = [0, 96], sizes = [8, 32], strides = [1, 1]} : vector<8x128xf32> to vector<8x32xf32>
    %cst_17 = arith.constant 2.000000e+00 : f32
    %52 = vector.broadcast %cst_17 : f32 to vector<8x32xf32>
    %53 = arith.mulf %52, %50 : vector<8x32xf32>
    %cst_18 = arith.constant 1.000000e+00 : f32
    %54 = vector.broadcast %cst_18 : f32 to vector<8x32xf32>
    %55 = arith.subf %53, %54 : vector<8x32xf32>
    %56 = arith.mulf %49, %36 : vector<8x32xf32>
    %57 = arith.mulf %48, %55 : vector<8x32xf32>
    %58 = arith.addf %56, %57 : vector<8x32xf32>
    %59 = math.tanh %58 : vector<8x32xf32>
    %60 = arith.mulf %51, %59 : vector<8x32xf32>
    %61 = vector.extract_strided_slice %14 {offsets = [16, 0], sizes = [8, 128], strides = [1, 1]} : vector<64x128xf32> to vector<8x128xf32>
    %62 = arith.truncf %60 : vector<8x32xf32> to vector<8x32xbf16>
    %cst_19 = arith.constant dense<0.000000e+00> : vector<8x128xf32>
    %63 = tpu.matmul %62, %0, %cst_19 {dimension_numbers = #tpu.dot_dimension_numbers<[1], [0], [0], [1], [0, 0, 1, 1], [], []>} : vector<8x32xbf16>, vector<32x128xbf16>, vector<8x128xf32> -> vector<8x128xf32>
    %64 = arith.addf %61, %63 : vector<8x128xf32>
    %65 = arith.negf %64 : vector<8x128xf32>
    %66 = math.exp %65 : vector<8x128xf32>
    %cst_20 = arith.constant 1.000000e+00 : f32
    %67 = vector.broadcast %cst_20 : f32 to vector<8x128xf32>
    %68 = arith.addf %67, %66 : vector<8x128xf32>
    %69 = arith.divf %67, %68 : vector<8x128xf32>
    %70 = vector.extract_strided_slice %69 {offsets = [0, 0], sizes = [8, 32], strides = [1, 1]} : vector<8x128xf32> to vector<8x32xf32>
    %71 = vector.extract_strided_slice %69 {offsets = [0, 32], sizes = [8, 32], strides = [1, 1]} : vector<8x128xf32> to vector<8x32xf32>
    %72 = vector.extract_strided_slice %69 {offsets = [0, 64], sizes = [8, 32], strides = [1, 1]} : vector<8x128xf32> to vector<8x32xf32>
    %73 = vector.extract_strided_slice %69 {offsets = [0, 96], sizes = [8, 32], strides = [1, 1]} : vector<8x128xf32> to vector<8x32xf32>
    %cst_21 = arith.constant 2.000000e+00 : f32
    %74 = vector.broadcast %cst_21 : f32 to vector<8x32xf32>
    %75 = arith.mulf %74, %72 : vector<8x32xf32>
    %cst_22 = arith.constant 1.000000e+00 : f32
    %76 = vector.broadcast %cst_22 : f32 to vector<8x32xf32>
    %77 = arith.subf %75, %76 : vector<8x32xf32>
    %78 = arith.mulf %71, %58 : vector<8x32xf32>
    %79 = arith.mulf %70, %77 : vector<8x32xf32>
    %80 = arith.addf %78, %79 : vector<8x32xf32>
    %81 = math.tanh %80 : vector<8x32xf32>
    %82 = arith.mulf %73, %81 : vector<8x32xf32>
    %83 = vector.extract_strided_slice %14 {offsets = [24, 0], sizes = [8, 128], strides = [1, 1]} : vector<64x128xf32> to vector<8x128xf32>
    %84 = arith.truncf %82 : vector<8x32xf32> to vector<8x32xbf16>
    %cst_23 = arith.constant dense<0.000000e+00> : vector<8x128xf32>
    %85 = tpu.matmul %84, %0, %cst_23 {dimension_numbers = #tpu.dot_dimension_numbers<[1], [0], [0], [1], [0, 0, 1, 1], [], []>} : vector<8x32xbf16>, vector<32x128xbf16>, vector<8x128xf32> -> vector<8x128xf32>
    %86 = arith.addf %83, %85 : vector<8x128xf32>
    %87 = arith.negf %86 : vector<8x128xf32>
    %88 = math.exp %87 : vector<8x128xf32>
    %cst_24 = arith.constant 1.000000e+00 : f32
    %89 = vector.broadcast %cst_24 : f32 to vector<8x128xf32>
    %90 = arith.addf %89, %88 : vector<8x128xf32>
    %91 = arith.divf %89, %90 : vector<8x128xf32>
    %92 = vector.extract_strided_slice %91 {offsets = [0, 0], sizes = [8, 32], strides = [1, 1]} : vector<8x128xf32> to vector<8x32xf32>
    %93 = vector.extract_strided_slice %91 {offsets = [0, 32], sizes = [8, 32], strides = [1, 1]} : vector<8x128xf32> to vector<8x32xf32>
    %94 = vector.extract_strided_slice %91 {offsets = [0, 64], sizes = [8, 32], strides = [1, 1]} : vector<8x128xf32> to vector<8x32xf32>
    %95 = vector.extract_strided_slice %91 {offsets = [0, 96], sizes = [8, 32], strides = [1, 1]} : vector<8x128xf32> to vector<8x32xf32>
    %cst_25 = arith.constant 2.000000e+00 : f32
    %96 = vector.broadcast %cst_25 : f32 to vector<8x32xf32>
    %97 = arith.mulf %96, %94 : vector<8x32xf32>
    %cst_26 = arith.constant 1.000000e+00 : f32
    %98 = vector.broadcast %cst_26 : f32 to vector<8x32xf32>
    %99 = arith.subf %97, %98 : vector<8x32xf32>
    %100 = arith.mulf %93, %80 : vector<8x32xf32>
    %101 = arith.mulf %92, %99 : vector<8x32xf32>
    %102 = arith.addf %100, %101 : vector<8x32xf32>
    %103 = math.tanh %102 : vector<8x32xf32>
    %104 = arith.mulf %95, %103 : vector<8x32xf32>
    %105 = vector.extract_strided_slice %14 {offsets = [32, 0], sizes = [8, 128], strides = [1, 1]} : vector<64x128xf32> to vector<8x128xf32>
    %106 = arith.truncf %104 : vector<8x32xf32> to vector<8x32xbf16>
    %cst_27 = arith.constant dense<0.000000e+00> : vector<8x128xf32>
    %107 = tpu.matmul %106, %0, %cst_27 {dimension_numbers = #tpu.dot_dimension_numbers<[1], [0], [0], [1], [0, 0, 1, 1], [], []>} : vector<8x32xbf16>, vector<32x128xbf16>, vector<8x128xf32> -> vector<8x128xf32>
    %108 = arith.addf %105, %107 : vector<8x128xf32>
    %109 = arith.negf %108 : vector<8x128xf32>
    %110 = math.exp %109 : vector<8x128xf32>
    %cst_28 = arith.constant 1.000000e+00 : f32
    %111 = vector.broadcast %cst_28 : f32 to vector<8x128xf32>
    %112 = arith.addf %111, %110 : vector<8x128xf32>
    %113 = arith.divf %111, %112 : vector<8x128xf32>
    %114 = vector.extract_strided_slice %113 {offsets = [0, 0], sizes = [8, 32], strides = [1, 1]} : vector<8x128xf32> to vector<8x32xf32>
    %115 = vector.extract_strided_slice %113 {offsets = [0, 32], sizes = [8, 32], strides = [1, 1]} : vector<8x128xf32> to vector<8x32xf32>
    %116 = vector.extract_strided_slice %113 {offsets = [0, 64], sizes = [8, 32], strides = [1, 1]} : vector<8x128xf32> to vector<8x32xf32>
    %117 = vector.extract_strided_slice %113 {offsets = [0, 96], sizes = [8, 32], strides = [1, 1]} : vector<8x128xf32> to vector<8x32xf32>
    %cst_29 = arith.constant 2.000000e+00 : f32
    %118 = vector.broadcast %cst_29 : f32 to vector<8x32xf32>
    %119 = arith.mulf %118, %116 : vector<8x32xf32>
    %cst_30 = arith.constant 1.000000e+00 : f32
    %120 = vector.broadcast %cst_30 : f32 to vector<8x32xf32>
    %121 = arith.subf %119, %120 : vector<8x32xf32>
    %122 = arith.mulf %115, %102 : vector<8x32xf32>
    %123 = arith.mulf %114, %121 : vector<8x32xf32>
    %124 = arith.addf %122, %123 : vector<8x32xf32>
    %125 = math.tanh %124 : vector<8x32xf32>
    %126 = arith.mulf %117, %125 : vector<8x32xf32>
    %127 = vector.extract_strided_slice %14 {offsets = [40, 0], sizes = [8, 128], strides = [1, 1]} : vector<64x128xf32> to vector<8x128xf32>
    %128 = arith.truncf %126 : vector<8x32xf32> to vector<8x32xbf16>
    %cst_31 = arith.constant dense<0.000000e+00> : vector<8x128xf32>
    %129 = tpu.matmul %128, %0, %cst_31 {dimension_numbers = #tpu.dot_dimension_numbers<[1], [0], [0], [1], [0, 0, 1, 1], [], []>} : vector<8x32xbf16>, vector<32x128xbf16>, vector<8x128xf32> -> vector<8x128xf32>
    %130 = arith.addf %127, %129 : vector<8x128xf32>
    %131 = arith.negf %130 : vector<8x128xf32>
    %132 = math.exp %131 : vector<8x128xf32>
    %cst_32 = arith.constant 1.000000e+00 : f32
    %133 = vector.broadcast %cst_32 : f32 to vector<8x128xf32>
    %134 = arith.addf %133, %132 : vector<8x128xf32>
    %135 = arith.divf %133, %134 : vector<8x128xf32>
    %136 = vector.extract_strided_slice %135 {offsets = [0, 0], sizes = [8, 32], strides = [1, 1]} : vector<8x128xf32> to vector<8x32xf32>
    %137 = vector.extract_strided_slice %135 {offsets = [0, 32], sizes = [8, 32], strides = [1, 1]} : vector<8x128xf32> to vector<8x32xf32>
    %138 = vector.extract_strided_slice %135 {offsets = [0, 64], sizes = [8, 32], strides = [1, 1]} : vector<8x128xf32> to vector<8x32xf32>
    %139 = vector.extract_strided_slice %135 {offsets = [0, 96], sizes = [8, 32], strides = [1, 1]} : vector<8x128xf32> to vector<8x32xf32>
    %cst_33 = arith.constant 2.000000e+00 : f32
    %140 = vector.broadcast %cst_33 : f32 to vector<8x32xf32>
    %141 = arith.mulf %140, %138 : vector<8x32xf32>
    %cst_34 = arith.constant 1.000000e+00 : f32
    %142 = vector.broadcast %cst_34 : f32 to vector<8x32xf32>
    %143 = arith.subf %141, %142 : vector<8x32xf32>
    %144 = arith.mulf %137, %124 : vector<8x32xf32>
    %145 = arith.mulf %136, %143 : vector<8x32xf32>
    %146 = arith.addf %144, %145 : vector<8x32xf32>
    %147 = math.tanh %146 : vector<8x32xf32>
    %148 = arith.mulf %139, %147 : vector<8x32xf32>
    %149 = vector.extract_strided_slice %14 {offsets = [48, 0], sizes = [8, 128], strides = [1, 1]} : vector<64x128xf32> to vector<8x128xf32>
    %150 = arith.truncf %148 : vector<8x32xf32> to vector<8x32xbf16>
    %cst_35 = arith.constant dense<0.000000e+00> : vector<8x128xf32>
    %151 = tpu.matmul %150, %0, %cst_35 {dimension_numbers = #tpu.dot_dimension_numbers<[1], [0], [0], [1], [0, 0, 1, 1], [], []>} : vector<8x32xbf16>, vector<32x128xbf16>, vector<8x128xf32> -> vector<8x128xf32>
    %152 = arith.addf %149, %151 : vector<8x128xf32>
    %153 = arith.negf %152 : vector<8x128xf32>
    %154 = math.exp %153 : vector<8x128xf32>
    %cst_36 = arith.constant 1.000000e+00 : f32
    %155 = vector.broadcast %cst_36 : f32 to vector<8x128xf32>
    %156 = arith.addf %155, %154 : vector<8x128xf32>
    %157 = arith.divf %155, %156 : vector<8x128xf32>
    %158 = vector.extract_strided_slice %157 {offsets = [0, 0], sizes = [8, 32], strides = [1, 1]} : vector<8x128xf32> to vector<8x32xf32>
    %159 = vector.extract_strided_slice %157 {offsets = [0, 32], sizes = [8, 32], strides = [1, 1]} : vector<8x128xf32> to vector<8x32xf32>
    %160 = vector.extract_strided_slice %157 {offsets = [0, 64], sizes = [8, 32], strides = [1, 1]} : vector<8x128xf32> to vector<8x32xf32>
    %161 = vector.extract_strided_slice %157 {offsets = [0, 96], sizes = [8, 32], strides = [1, 1]} : vector<8x128xf32> to vector<8x32xf32>
    %cst_37 = arith.constant 2.000000e+00 : f32
    %162 = vector.broadcast %cst_37 : f32 to vector<8x32xf32>
    %163 = arith.mulf %162, %160 : vector<8x32xf32>
    %cst_38 = arith.constant 1.000000e+00 : f32
    %164 = vector.broadcast %cst_38 : f32 to vector<8x32xf32>
    %165 = arith.subf %163, %164 : vector<8x32xf32>
    %166 = arith.mulf %159, %146 : vector<8x32xf32>
    %167 = arith.mulf %158, %165 : vector<8x32xf32>
    %168 = arith.addf %166, %167 : vector<8x32xf32>
    %169 = math.tanh %168 : vector<8x32xf32>
    %170 = arith.mulf %161, %169 : vector<8x32xf32>
    %171 = vector.extract_strided_slice %14 {offsets = [56, 0], sizes = [8, 128], strides = [1, 1]} : vector<64x128xf32> to vector<8x128xf32>
    %172 = arith.truncf %170 : vector<8x32xf32> to vector<8x32xbf16>
    %cst_39 = arith.constant dense<0.000000e+00> : vector<8x128xf32>
    %173 = tpu.matmul %172, %0, %cst_39 {dimension_numbers = #tpu.dot_dimension_numbers<[1], [0], [0], [1], [0, 0, 1, 1], [], []>} : vector<8x32xbf16>, vector<32x128xbf16>, vector<8x128xf32> -> vector<8x128xf32>
    %174 = arith.addf %171, %173 : vector<8x128xf32>
    %175 = arith.negf %174 : vector<8x128xf32>
    %176 = math.exp %175 : vector<8x128xf32>
    %cst_40 = arith.constant 1.000000e+00 : f32
    %177 = vector.broadcast %cst_40 : f32 to vector<8x128xf32>
    %178 = arith.addf %177, %176 : vector<8x128xf32>
    %179 = arith.divf %177, %178 : vector<8x128xf32>
    %180 = vector.extract_strided_slice %179 {offsets = [0, 0], sizes = [8, 32], strides = [1, 1]} : vector<8x128xf32> to vector<8x32xf32>
    %181 = vector.extract_strided_slice %179 {offsets = [0, 32], sizes = [8, 32], strides = [1, 1]} : vector<8x128xf32> to vector<8x32xf32>
    %182 = vector.extract_strided_slice %179 {offsets = [0, 64], sizes = [8, 32], strides = [1, 1]} : vector<8x128xf32> to vector<8x32xf32>
    %183 = vector.extract_strided_slice %179 {offsets = [0, 96], sizes = [8, 32], strides = [1, 1]} : vector<8x128xf32> to vector<8x32xf32>
    %cst_41 = arith.constant 2.000000e+00 : f32
    %184 = vector.broadcast %cst_41 : f32 to vector<8x32xf32>
    %185 = arith.mulf %184, %182 : vector<8x32xf32>
    %cst_42 = arith.constant 1.000000e+00 : f32
    %186 = vector.broadcast %cst_42 : f32 to vector<8x32xf32>
    %187 = arith.subf %185, %186 : vector<8x32xf32>
    %188 = arith.mulf %181, %168 : vector<8x32xf32>
    %189 = arith.mulf %180, %187 : vector<8x32xf32>
    %190 = arith.addf %188, %189 : vector<8x32xf32>
    %191 = math.tanh %190 : vector<8x32xf32>
    %192 = arith.mulf %183, %191 : vector<8x32xf32>
    %193 = arith.truncf %192 : vector<8x32xf32> to vector<8x32xbf16>
    %cst_43 = arith.constant dense<0.000000e+00> : vector<8x128xf32>
    %194 = tpu.matmul %193, %1, %cst_43 {dimension_numbers = #tpu.dot_dimension_numbers<[1], [0], [0], [1], [0, 0, 1, 1], [], []>} : vector<8x32xbf16>, vector<32x128xbf16>, vector<8x128xf32> -> vector<8x128xf32>
    %195 = vector.broadcast %3 : vector<1x128xf32> to vector<8x128xf32>
    %196 = arith.addf %194, %195 : vector<8x128xf32>
    %c0_44 = arith.constant 0 : index
    %c0_45 = arith.constant 0 : index
    %197 = vector.load %arg4[%c0_44, %c0_45] : memref<8x128xf32, #tpu.memory_space<vmem>>, vector<8x128xf32>
    tpu.vector_store %arg4[%c0_44, %c0_45], %196 {strides = array<i32>} : memref<8x128xf32, #tpu.memory_space<vmem>>, vector<8x128xf32>,
    return
  }
}

</mosaic_0001>

<llo_original>
// kernel: lstm_baseline_forward.1
$region0: #{lstm_baseline_forward.1}
  #allocation0 [shape = 'u32[]', space=smem, size = 0x4, offset = 0x4, fixed_abs, tag = 'smem constant byte address 0x4 - core index']
  #allocation1 [shape = 'u32[144,128]{1,0:T(1,128)}', space=vmem, size = 0x12000, scoped, tag = 'internal scratch']
  %s0 = inlined_call_operand.vmem [shape: s32[64,1], index: 0, kind: input, shape index: {}]
  %s1 = inlined_call_operand.vmem [shape: bf16[128,128], index: 1, kind: input, shape index: {}]
  %s2 = inlined_call_operand.vmem [shape: bf16[32,256], index: 2, kind: input, shape index: {}]
  %s3 = inlined_call_operand.vmem [shape: f32[2,128], index: 3, kind: input, shape index: {}]
  %s4 = inlined_call_operand.vmem [shape: f32[8,128], index: 4, kind: output, shape index: {}]
  %s5 = sld [smem:[#allocation0]]
  $region26: #{lstm_baseline_forward.1} parent=0
    _
  %s7 = ssub.s32 1, %s5
  %s8 = scalar_select 0, %s7, %s5
  // Predicated region
  $region2: #{lstm_baseline_forward.1} parent=0 // pred_check
    _
  $region3: #{lstm_baseline_forward.1} parent=0 // pred_check_branch
    %10 = sbr.rel (0) target = $region5
  $region4: #{lstm_baseline_forward.1} parent=0 // pred_region
    _
  $region5: #{lstm_baseline_forward.1} parent=0 // pred_fallthru
    _
  // Predicated region
  $region6: #{lstm_baseline_forward.1} parent=0 // pred_check
    _
  $region7: #{lstm_baseline_forward.1} parent=0 // pred_check_branch
    %12 = sbr.rel (0) target = $region9
  $region8: #{lstm_baseline_forward.1} parent=0 // pred_region
    _
  $region9: #{lstm_baseline_forward.1} parent=0 // pred_fallthru
    _
  // Predicated region
  $region10: #{lstm_baseline_forward.1} parent=0 // pred_check
    _
  $region11: #{lstm_baseline_forward.1} parent=0 // pred_check_branch
    %14 = sbr.rel (0) target = $region13
  $region12: #{lstm_baseline_forward.1} parent=0 // pred_region
    _
  $region13: #{lstm_baseline_forward.1} parent=0 // pred_fallthru
    _
  // Predicated region
  $region14: #{lstm_baseline_forward.1} parent=0 // pred_check
    _
  $region15: #{lstm_baseline_forward.1} parent=0 // pred_check_branch
    %16 = sbr.rel (0) target = $region17
  $region16: #{lstm_baseline_forward.1} parent=0 // pred_region
    _
  $region17: #{lstm_baseline_forward.1} parent=0 // pred_fallthru
    _
  %v18 = vld [vmem:[%s2] sm:$0xf]
  %v19 = vld [vmem:[%s2 + $0x8] sm:$0xf]
  %v20 = vld [vmem:[%s2 + $0x10] sm:$0xf]
  %v21 = vld [vmem:[%s2 + $0x18] sm:$0xf]
  %v22 = vld [vmem:[%s2 + $0x4] sm:$0xf]
  %v23 = vld [vmem:[%s2 + $0xc] sm:$0xf]
  %v24 = vld [vmem:[%s2 + $0x14] sm:$0xf]
  %v25 = vld [vmem:[%s2 + $0x1c] sm:$0xf]
  %v26 = vld [vmem:[%s3] sm:$0x1]
  %v27 = vld [vmem:[%s3 + $0x1] sm:$0x1]
  %v28 = vld [vmem:[%s0] sm:$0xff]
  %v29 = vld [vmem:[%s0 + $0x8] sm:$0xff]
  %v30 = vld [vmem:[%s0 + $0x10] sm:$0xff]
  %v31 = vld [vmem:[%s0 + $0x18] sm:$0xff]
  %v32 = vld [vmem:[%s0 + $0x20] sm:$0xff]
  %v33 = vld [vmem:[%s0 + $0x28] sm:$0xff]
  %v34 = vld [vmem:[%s0 + $0x30] sm:$0xff]
  %v35 = vld [vmem:[%s0 + $0x38] sm:$0xff]
  %v36 = vlaneseq
  %v37 = vand.u32 %v36, 127
  %38 = vset.pattern.permute.xlu0 0
  %39 = vperm.xlu0 %38, %v28
  %v40 = vpop.permute.xlu0 %39
  %41 = vset.pattern.permute.xlu0 0
  %42 = vperm.xlu0 %41, %v29
  %v43 = vpop.permute.xlu0 %42
  %44 = vset.pattern.permute.xlu0 0
  %45 = vperm.xlu0 %44, %v30
  %v46 = vpop.permute.xlu0 %45
  %47 = vset.pattern.permute.xlu0 0
  %48 = vperm.xlu0 %47, %v31
  %v49 = vpop.permute.xlu0 %48
  %50 = vset.pattern.permute.xlu0 0
  %51 = vperm.xlu0 %50, %v32
  %v52 = vpop.permute.xlu0 %51
  %53 = vset.pattern.permute.xlu0 0
  %54 = vperm.xlu0 %53, %v33
  %v55 = vpop.permute.xlu0 %54
  %56 = vset.pattern.permute.xlu0 0
  %57 = vperm.xlu0 %56, %v34
  %v58 = vpop.permute.xlu0 %57
  %59 = vset.pattern.permute.xlu0 0
  %60 = vperm.xlu0 %59, %v35
  %v61 = vpop.permute.xlu0 %60
  %vm62 = vcmp.eq.s32.totalorder %v40, %v37
  %vm63 = vcmp.eq.s32.totalorder %v43, %v37
  %vm64 = vcmp.eq.s32.totalorder %v46, %v37
  %vm65 = vcmp.eq.s32.totalorder %v49, %v37
  %vm66 = vcmp.eq.s32.totalorder %v52, %v37
  %vm67 = vcmp.eq.s32.totalorder %v55, %v37
  %vm68 = vcmp.eq.s32.totalorder %v58, %v37
  %vm69 = vcmp.eq.s32.totalorder %v61, %v37
  %v70 = vsel %vm62, 1, 0
  %v71 = vsel %vm63, 1, 0
  %v72 = vsel %vm64, 1, 0
  %v73 = vsel %vm65, 1, 0
  %v74 = vsel %vm66, 1, 0
  %v75 = vsel %vm67, 1, 0
  %v76 = vsel %vm68, 1, 0
  %v77 = vsel %vm69, 1, 0
  %v78 = vcvt.s32.f32 %v70
  %v79 = vcvt.s32.f32 %v71
  %v80 = vcvt.s32.f32 %v72
  %v81 = vcvt.s32.f32 %v73
  %v82 = vcvt.s32.f32 %v74
  %v83 = vcvt.s32.f32 %v75
  %v84 = vcvt.s32.f32 %v76
  %v85 = vcvt.s32.f32 %v77
  %v86 = vpack.c.bf16 %v79, %v78
  %v87 = vpack.c.bf16 %v81, %v80
  %v88 = vpack.c.bf16 %v83, %v82
  %v89 = vpack.c.bf16 %v85, %v84
  %v90 = vld [vmem:[%s1] sm:$0xf]
  %v91 = vld [vmem:[%s1 + $0x4] sm:$0xf]
  %v92 = vld [vmem:[%s1 + $0x8] sm:$0xf]
  %v93 = vld [vmem:[%s1 + $0xc] sm:$0xf]
  %v94 = vld [vmem:[%s1 + $0x10] sm:$0xf]
  %v95 = vld [vmem:[%s1 + $0x14] sm:$0xf]
  %v96 = vld [vmem:[%s1 + $0x18] sm:$0xf]
  %v97 = vld [vmem:[%s1 + $0x1c] sm:$0xf]
  %v98 = vld [vmem:[%s1 + $0x20] sm:$0xf]
  %v99 = vld [vmem:[%s1 + $0x24] sm:$0xf]
  %v100 = vld [vmem:[%s1 + $0x28] sm:$0xf]
  %v101 = vld [vmem:[%s1 + $0x2c] sm:$0xf]
  %v102 = vld [vmem:[%s1 + $0x30] sm:$0xf]
  %v103 = vld [vmem:[%s1 + $0x34] sm:$0xf]
  %v104 = vld [vmem:[%s1 + $0x38] sm:$0xf]
  %v105 = vld [vmem:[%s1 + $0x3c] sm:$0xf]
  %v106 = vlaneseq
  %v107 = vshrl.u32 %v106, 7
  %v108 = vsub.s32 0, %v107
  %v109 = vrot.slane %v26, %v108
  %v126 = vunpack.c.l.b16 %v90
  %v127 = vunpack.c.l.b16 %v91
  %v128 = vunpack.c.l.b16 %v92
  %v129 = vunpack.c.l.b16 %v93
  %v130 = vunpack.c.l.b16 %v94
  %v131 = vunpack.c.l.b16 %v95
  %v132 = vunpack.c.l.b16 %v96
  %v133 = vunpack.c.l.b16 %v97
  %v134 = vunpack.c.l.b16 %v98
  %v135 = vunpack.c.l.b16 %v99
  %v136 = vunpack.c.l.b16 %v100
  %v137 = vunpack.c.l.b16 %v101
  %v138 = vunpack.c.l.b16 %v102
  %v139 = vunpack.c.l.b16 %v103
  %v140 = vunpack.c.l.b16 %v104
  %v141 = vunpack.c.l.b16 %v105
  %v142 = vpack.c.b16 %v127, %v126
  %v143 = vpack.c.b16 %v129, %v128
  %v144 = vpack.c.b16 %v131, %v130
  %v145 = vpack.c.b16 %v133, %v132
  %v146 = vpack.c.b16 %v135, %v134
  %v147 = vpack.c.b16 %v137, %v136
  %v148 = vpack.c.b16 %v139, %v138
  %v149 = vpack.c.b16 %v141, %v140
  %158 = vmatprep.subr.bf16.mxu0 0
  %159 = vmatpush1.bf16.msra.mxu0 %v142
  %160 = vmatprep.subr.bf16.mxu0 0
  %161 = vmatpush1.bf16.msra.mxu0 %v143
  %162 = vmatprep.subr.bf16.mxu0 0
  %163 = vmatpush1.bf16.msra.mxu0 %v144
  %164 = vmatprep.subr.bf16.mxu0 0
  %165 = vmatpush1.bf16.msra.mxu0 %v145
  %166 = vmatprep.subr.bf16.mxu0 0
  %167 = vmatpush1.bf16.msra.mxu0 %v146
  %168 = vmatprep.subr.bf16.mxu0 0
  %169 = vmatpush1.bf16.msra.mxu0 %v147
  %170 = vmatprep.subr.bf16.mxu0 0
  %171 = vmatpush1.bf16.msra.mxu0 %v148
  %172 = vmatprep.subr.bf16.mxu0 0
  %173 = vmatpush1.bf16.msra.mxu0 %v149
  %174 = vmatprep.subr.bf16.mxu0 0
  %175 = vmatpush1.bf16.msra.mxu0 0
  %176 = vmatprep.subr.bf16.mxu0 0
  %177 = vmatpush1.bf16.msra.mxu0 0
  %178 = vmatprep.subr.bf16.mxu0 0
  %179 = vmatpush1.bf16.msra.mxu0 0
  %180 = vmatprep.subr.bf16.mxu0 0
  %181 = vmatpush1.bf16.msra.mxu0 0
  %182 = vmatprep.subr.bf16.mxu0 0
  %183 = vmatpush1.bf16.msra.mxu0 0
  %184 = vmatprep.subr.bf16.mxu0 0
  %185 = vmatpush1.bf16.msra.mxu0 0
  %186 = vmatprep.subr.bf16.mxu0 0
  %187 = vmatpush1.bf16.msra.mxu0 0
  %188 = vmatprep.subr.bf16.mxu0 0
  %189 = vmatpush1.bf16.msra.mxu0 0
  %190 = vmatprep.mubr.bf16.mxu0 0
  %191 = vmatmul.mubr.bf16.gmra.mrb[0].mxu0 %v86
  %v192 = vpop.f32.mrb[0].mxu0
  %v193 = vadd.f32 %v109, %v192
  %v194 = vpop.f32.mrb[0].mxu0
  %v195 = vpop.f32.mrb[0].mxu0
  %v196 = vadd.f32 %v109, %v195
  %v197 = vpop.f32.mrb[0].mxu0
  %198 = vmatprep.mubr.bf16.mxu0 0
  %199 = vmatmul.mubr.bf16.gmra.mrb[0].mxu0 %v87
  %v200 = vpop.f32.mrb[0].mxu0
  %v201 = vadd.f32 %v109, %v200
  %v202 = vpop.f32.mrb[0].mxu0
  %v203 = vpop.f32.mrb[0].mxu0
  %v204 = vadd.f32 %v109, %v203
  %v205 = vpop.f32.mrb[0].mxu0
  %206 = vmatprep.mubr.bf16.mxu0 0
  %207 = vmatmul.mubr.bf16.gmra.mrb[0].mxu0 %v88
  %v208 = vpop.f32.mrb[0].mxu0
  %v209 = vadd.f32 %v109, %v208
  %v210 = vpop.f32.mrb[0].mxu0
  %v211 = vpop.f32.mrb[0].mxu0
  %v212 = vadd.f32 %v109, %v211
  %v213 = vpop.f32.mrb[0].mxu0
  %214 = vmatprep.mubr.bf16.mxu0 0
  %215 = vmatmul.mubr.bf16.gmra.mrb[0].mxu0 %v89
  %v216 = vpop.f32.mrb[0].mxu0
  %v217 = vadd.f32 %v109, %v216
  %v218 = vpop.f32.mrb[0].mxu0
  %v219 = vpop.f32.mrb[0].mxu0
  %v220 = vadd.f32 %v109, %v219
  %v221 = vpop.f32.mrb[0].mxu0
  %222 = vdwg.mxu0
  %v227 = vunpack.c.l.b16 %v18
  %v228 = vunpack.c.l.b16 %v19
  %v229 = vunpack.c.l.b16 %v20
  %v230 = vunpack.c.l.b16 %v21
  %v231 = vpack.c.b16 %v228, %v227
  %v232 = vpack.c.b16 %v230, %v229
  %vm235 = vcmask 261120
  %v237 = vsel %vm235, 0, 0
  %239 = vmatprep.subr.bf16.mxu0 0
  %240 = vmatpush1.bf16.msra.mxu0 %v231
  %241 = vmatprep.subr.bf16.mxu0 0
  %242 = vmatpush1.bf16.msra.mxu0 %v232
  %243 = vmatprep.subr.bf16.mxu0 0
  %244 = vmatpush1.bf16.msra.mxu0 0
  %245 = vmatprep.subr.bf16.mxu0 0
  %246 = vmatpush1.bf16.msra.mxu0 0
  %247 = vmatprep.subr.bf16.mxu0 0
  %248 = vmatpush1.bf16.msra.mxu0 0
  %249 = vmatprep.subr.bf16.mxu0 0
  %250 = vmatpush1.bf16.msra.mxu0 0
  %251 = vmatprep.subr.bf16.mxu0 0
  %252 = vmatpush1.bf16.msra.mxu0 0
  %253 = vmatprep.subr.bf16.mxu0 0
  %254 = vmatpush1.bf16.msra.mxu0 0
  %255 = vmatprep.subr.bf16.mxu0 0
  %256 = vmatpush1.bf16.msra.mxu0 0
  %257 = vmatprep.subr.bf16.mxu0 0
  %258 = vmatpush1.bf16.msra.mxu0 0
  %259 = vmatprep.subr.bf16.mxu0 0
  %260 = vmatpush1.bf16.msra.mxu0 0
  %261 = vmatprep.subr.bf16.mxu0 0
  %262 = vmatpush1.bf16.msra.mxu0 0
  %263 = vmatprep.subr.bf16.mxu0 0
  %264 = vmatpush1.bf16.msra.mxu0 0
  %265 = vmatprep.subr.bf16.mxu0 0
  %266 = vmatpush1.bf16.msra.mxu0 0
  %267 = vmatprep.subr.bf16.mxu0 0
  %268 = vmatpush1.bf16.msra.mxu0 0
  %269 = vmatprep.subr.bf16.mxu0 0
  %270 = vmatpush1.bf16.msra.mxu0 0
  %271 = vmatprep.mubr.bf16.mxu0 0
  %272 = vmatmul.mubr.bf16.gmra.mrb[0].mxu0 %v237
  %v273 = vpop.f32.mrb[0].mxu0
  %v274 = vadd.f32 0.0, %v273
  %v275 = vpop.f32.mrb[0].mxu0
  %v276 = vpop.f32.mrb[0].mxu0
  %v277 = vpop.f32.mrb[0].mxu0
  %278 = vdwg.mxu0
  %v279 = vadd.f32 %v193, %v274
  %v280 = vxor.u32 %v279, 2147483648
  %v281 = vmul.f32 %v280, 1.442695
  %v282 = vpow.pop %v281
  %v283 = vadd.f32 %v282, 1.0
  %v284 = vrcp.pop %v283
  %v285 = vmul.f32 1.0, %v284
  %v286 = vmul.f32 %v285, 2.0
  %v287 = vsub.f32 %v286, 1.0
  %v288 = vmul.f32 %v285, 0.0
  %290 = vrot.lane.b32.xlu0 %v287, 64
  %v291 = vpop.permute.xlu0 %290
  %v293 = vmul.f32 %v285, %v291
  %295 = vrot.lane.b32.xlu0 %v293, 32
  %v296 = vpop.permute.xlu0 %295
  %v298 = vadd.f32 %v288, %v296
  %v299 = vtanh.pop %v298
  %301 = vrot.lane.b32.xlu0 %v299, 64
  %v302 = vpop.permute.xlu0 %301
  %v304 = vmul.f32 %v285, %v302
  %v305 = vpack.c.bf16 %v304, %v304
  %307 = vrot.lane.b32.xlu0 %v305, 32
  %v308 = vpop.permute.xlu0 %307
  %v310 = vsel %vm235, %v308, 0
  %312 = vmatprep.subr.bf16.mxu0 0
  %313 = vmatpush1.bf16.msra.mxu0 %v231
  %314 = vmatprep.subr.bf16.mxu0 0
  %315 = vmatpush1.bf16.msra.mxu0 %v232
  %316 = vmatprep.subr.bf16.mxu0 0
  %317 = vmatpush1.bf16.msra.mxu0 0
  %318 = vmatprep.subr.bf16.mxu0 0
  %319 = vmatpush1.bf16.msra.mxu0 0
  %320 = vmatprep.subr.bf16.mxu0 0
  %321 = vmatpush1.bf16.msra.mxu0 0
  %322 = vmatprep.subr.bf16.mxu0 0
  %323 = vmatpush1.bf16.msra.mxu0 0
  %324 = vmatprep.subr.bf16.mxu0 0
  %325 = vmatpush1.bf16.msra.mxu0 0
  %326 = vmatprep.subr.bf16.mxu0 0
  %327 = vmatpush1.bf16.msra.mxu0 0
  %328 = vmatprep.subr.bf16.mxu0 0
  %329 = vmatpush1.bf16.msra.mxu0 0
  %330 = vmatprep.subr.bf16.mxu0 0
  %331 = vmatpush1.bf16.msra.mxu0 0
  %332 = vmatprep.subr.bf16.mxu0 0
  %333 = vmatpush1.bf16.msra.mxu0 0
  %334 = vmatprep.subr.bf16.mxu0 0
  %335 = vmatpush1.bf16.msra.mxu0 0
  %336 = vmatprep.subr.bf16.mxu0 0
  %337 = vmatpush1.bf16.msra.mxu0 0
  %338 = vmatprep.subr.bf16.mxu0 0
  %339 = vmatpush1.bf16.msra.mxu0 0
  %340 = vmatprep.subr.bf16.mxu0 0
  %341 = vmatpush1.bf16.msra.mxu0 0
  %342 = vmatprep.subr.bf16.mxu0 0
  %343 = vmatpush1.bf16.msra.mxu0 0
  %344 = vmatprep.mubr.bf16.mxu0 0
  %345 = vmatmul.mubr.bf16.gmra.mrb[0].mxu0 %v310
  %v346 = vpop.f32.mrb[0].mxu0
  %v347 = vadd.f32 0.0, %v346
  %v348 = vpop.f32.mrb[0].mxu0
  %v349 = vpop.f32.mrb[0].mxu0
  %v350 = vpop.f32.mrb[0].mxu0
  %351 = vdwg.mxu0
  %v352 = vadd.f32 %v196, %v347
  %v353 = vxor.u32 %v352, 2147483648
  %v354 = vmul.f32 %v353, 1.442695
  %v355 = vpow.pop %v354
  %v356 = vadd.f32 %v355, 1.0
  %v357 = vrcp.pop %v356
  %v358 = vmul.f32 1.0, %v357
  %v359 = vmul.f32 %v358, 2.0
  %v360 = vsub.f32 %v359, 1.0
  %v361 = vmul.f32 %v358, %v298
  %363 = vrot.lane.b32.xlu0 %v360, 64
  %v364 = vpop.permute.xlu0 %363
  %v366 = vmul.f32 %v358, %v364
  %368 = vrot.lane.b32.xlu0 %v366, 32
  %v369 = vpop.permute.xlu0 %368
  %v371 = vadd.f32 %v361, %v369
  %v372 = vtanh.pop %v371
  %374 = vrot.lane.b32.xlu0 %v372, 64
  %v375 = vpop.permute.xlu0 %374
  %v377 = vmul.f32 %v358, %v375
  %v378 = vpack.c.bf16 %v377, %v377
  %380 = vrot.lane.b32.xlu0 %v378, 32
  %v381 = vpop.permute.xlu0 %380
  %v383 = vsel %vm235, %v381, 0
  %385 = vmatprep.subr.bf16.mxu0 0
  %386 = vmatpush1.bf16.msra.mxu0 %v231
  %387 = vmatprep.subr.bf16.mxu0 0
  %388 = vmatpush1.bf16.msra.mxu0 %v232
  %389 = vmatprep.subr.bf16.mxu0 0
  %390 = vmatpush1.bf16.msra.mxu0 0
  %391 = vmatprep.subr.bf16.mxu0 0
  %392 = vmatpush1.bf16.msra.mxu0 0
  %393 = vmatprep.subr.bf16.mxu0 0
  %394 = vmatpush1.bf16.msra.mxu0 0
  %395 = vmatprep.subr.bf16.mxu0 0
  %396 = vmatpush1.bf16.msra.mxu0 0
  %397 = vmatprep.subr.bf16.mxu0 0
  %398 = vmatpush1.bf16.msra.mxu0 0
  %399 = vmatprep.subr.bf16.mxu0 0
  %400 = vmatpush1.bf16.msra.mxu0 0
  %401 = vmatprep.subr.bf16.mxu0 0
  %402 = vmatpush1.bf16.msra.mxu0 0
  %403 = vmatprep.subr.bf16.mxu0 0
  %404 = vmatpush1.bf16.msra.mxu0 0
  %405 = vmatprep.subr.bf16.mxu0 0
  %406 = vmatpush1.bf16.msra.mxu0 0
  %407 = vmatprep.subr.bf16.mxu0 0
  %408 = vmatpush1.bf16.msra.mxu0 0
  %409 = vmatprep.subr.bf16.mxu0 0
  %410 = vmatpush1.bf16.msra.mxu0 0
  %411 = vmatprep.subr.bf16.mxu0 0
  %412 = vmatpush1.bf16.msra.mxu0 0
  %413 = vmatprep.subr.bf16.mxu0 0
  %414 = vmatpush1.bf16.msra.mxu0 0
  %415 = vmatprep.subr.bf16.mxu0 0
  %416 = vmatpush1.bf16.msra.mxu0 0
  %417 = vmatprep.mubr.bf16.mxu0 0
  %418 = vmatmul.mubr.bf16.gmra.mrb[0].mxu0 %v383
  %v419 = vpop.f32.mrb[0].mxu0
  %v420 = vadd.f32 0.0, %v419
  %v421 = vpop.f32.mrb[0].mxu0
  %v422 = vpop.f32.mrb[0].mxu0
  %v423 = vpop.f32.mrb[0].mxu0
  %424 = vdwg.mxu0
  %v425 = vadd.f32 %v201, %v420
  %v426 = vxor.u32 %v425, 2147483648
  %v427 = vmul.f32 %v426, 1.442695
  %v428 = vpow.pop %v427
  %v429 = vadd.f32 %v428, 1.0
  %v430 = vrcp.pop %v429
  %v431 = vmul.f32 1.0, %v430
  %v432 = vmul.f32 %v431, 2.0
  %v433 = vsub.f32 %v432, 1.0
  %v434 = vmul.f32 %v431, %v371
  %436 = vrot.lane.b32.xlu0 %v433, 64
  %v437 = vpop.permute.xlu0 %436
  %v439 = vmul.f32 %v431, %v437
  %441 = vrot.lane.b32.xlu0 %v439, 32
  %v442 = vpop.permute.xlu0 %441
  %v444 = vadd.f32 %v434, %v442
  %v445 = vtanh.pop %v444
  %447 = vrot.lane.b32.xlu0 %v445, 64
  %v448 = vpop.permute.xlu0 %447
  %v450 = vmul.f32 %v431, %v448
  %v451 = vpack.c.bf16 %v450, %v450
  %453 = vrot.lane.b32.xlu0 %v451, 32
  %v454 = vpop.permute.xlu0 %453
  %v456 = vsel %vm235, %v454, 0
  %458 = vmatprep.subr.bf16.mxu0 0
  %459 = vmatpush1.bf16.msra.mxu0 %v231
  %460 = vmatprep.subr.bf16.mxu0 0
  %461 = vmatpush1.bf16.msra.mxu0 %v232
  %462 = vmatprep.subr.bf16.mxu0 0
  %463 = vmatpush1.bf16.msra.mxu0 0
  %464 = vmatprep.subr.bf16.mxu0 0
  %465 = vmatpush1.bf16.msra.mxu0 0
  %466 = vmatprep.subr.bf16.mxu0 0
  %467 = vmatpush1.bf16.msra.mxu0 0
  %468 = vmatprep.subr.bf16.mxu0 0
  %469 = vmatpush1.bf16.msra.mxu0 0
  %470 = vmatprep.subr.bf16.mxu0 0
  %471 = vmatpush1.bf16.msra.mxu0 0
  %472 = vmatprep.subr.bf16.mxu0 0
  %473 = vmatpush1.bf16.msra.mxu0 0
  %474 = vmatprep.subr.bf16.mxu0 0
  %475 = vmatpush1.bf16.msra.mxu0 0
  %476 = vmatprep.subr.bf16.mxu0 0
  %477 = vmatpush1.bf16.msra.mxu0 0
  %478 = vmatprep.subr.bf16.mxu0 0
  %479 = vmatpush1.bf16.msra.mxu0 0
  %480 = vmatprep.subr.bf16.mxu0 0
  %481 = vmatpush1.bf16.msra.mxu0 0
  %482 = vmatprep.subr.bf16.mxu0 0
  %483 = vmatpush1.bf16.msra.mxu0 0
  %484 = vmatprep.subr.bf16.mxu0 0
  %485 = vmatpush1.bf16.msra.mxu0 0
  %486 = vmatprep.subr.bf16.mxu0 0
  %487 = vmatpush1.bf16.msra.mxu0 0
  %488 = vmatprep.subr.bf16.mxu0 0
  %489 = vmatpush1.bf16.msra.mxu0 0
  %490 = vmatprep.mubr.bf16.mxu0 0
  %491 = vmatmul.mubr.bf16.gmra.mrb[0].mxu0 %v456
  %v492 = vpop.f32.mrb[0].mxu0
  %v493 = vadd.f32 0.0, %v492
  %v494 = vpop.f32.mrb[0].mxu0
  %v495 = vpop.f32.mrb[0].mxu0
  %v496 = vpop.f32.mrb[0].mxu0
  %497 = vdwg.mxu0
  %v498 = vadd.f32 %v204, %v493
  %v499 = vxor.u32 %v498, 2147483648
  %v500 = vmul.f32 %v499, 1.442695
  %v501 = vpow.pop %v500
  %v502 = vadd.f32 %v501, 1.0
  %v503 = vrcp.pop %v502
  %v504 = vmul.f32 1.0, %v503
  %v505 = vmul.f32 %v504, 2.0
  %v506 = vsub.f32 %v505, 1.0
  %v507 = vmul.f32 %v504, %v444
  %509 = vrot.lane.b32.xlu0 %v506, 64
  %v510 = vpop.permute.xlu0 %509
  %v512 = vmul.f32 %v504, %v510
  %514 = vrot.lane.b32.xlu0 %v512, 32
  %v515 = vpop.permute.xlu0 %514
  %v517 = vadd.f32 %v507, %v515
  %v518 = vtanh.pop %v517
  %520 = vrot.lane.b32.xlu0 %v518, 64
  %v521 = vpop.permute.xlu0 %520
  %v523 = vmul.f32 %v504, %v521
  %v524 = vpack.c.bf16 %v523, %v523
  %526 = vrot.lane.b32.xlu0 %v524, 32
  %v527 = vpop.permute.xlu0 %526
  %v529 = vsel %vm235, %v527, 0
  %531 = vmatprep.subr.bf16.mxu0 0
  %532 = vmatpush1.bf16.msra.mxu0 %v231
  %533 = vmatprep.subr.bf16.mxu0 0
  %534 = vmatpush1.bf16.msra.mxu0 %v232
  %535 = vmatprep.subr.bf16.mxu0 0
  %536 = vmatpush1.bf16.msra.mxu0 0
  %537 = vmatprep.subr.bf16.mxu0 0
  %538 = vmatpush1.bf16.msra.mxu0 0
  %539 = vmatprep.subr.bf16.mxu0 0
  %540 = vmatpush1.bf16.msra.mxu0 0
  %541 = vmatprep.subr.bf16.mxu0 0
  %542 = vmatpush1.bf16.msra.mxu0 0
  %543 = vmatprep.subr.bf16.mxu0 0
  %544 = vmatpush1.bf16.msra.mxu0 0
  %545 = vmatprep.subr.bf16.mxu0 0
  %546 = vmatpush1.bf16.msra.mxu0 0
  %547 = vmatprep.subr.bf16.mxu0 0
  %548 = vmatpush1.bf16.msra.mxu0 0
  %549 = vmatprep.subr.bf16.mxu0 0
  %550 = vmatpush1.bf16.msra.mxu0 0
  %551 = vmatprep.subr.bf16.mxu0 0
  %552 = vmatpush1.bf16.msra.mxu0 0
  %553 = vmatprep.subr.bf16.mxu0 0
  %554 = vmatpush1.bf16.msra.mxu0 0
  %555 = vmatprep.subr.bf16.mxu0 0
  %556 = vmatpush1.bf16.msra.mxu0 0
  %557 = vmatprep.subr.bf16.mxu0 0
  %558 = vmatpush1.bf16.msra.mxu0 0
  %559 = vmatprep.subr.bf16.mxu0 0
  %560 = vmatpush1.bf16.msra.mxu0 0
  %561 = vmatprep.subr.bf16.mxu0 0
  %562 = vmatpush1.bf16.msra.mxu0 0
  %563 = vmatprep.mubr.bf16.mxu0 0
  %564 = vmatmul.mubr.bf16.gmra.mrb[0].mxu0 %v529
  %v565 = vpop.f32.mrb[0].mxu0
  %v566 = vadd.f32 0.0, %v565
  %v567 = vpop.f32.mrb[0].mxu0
  %v568 = vpop.f32.mrb[0].mxu0
  %v569 = vpop.f32.mrb[0].mxu0
  %570 = vdwg.mxu0
  %v571 = vadd.f32 %v209, %v566
  %v572 = vxor.u32 %v571, 2147483648
  %v573 = vmul.f32 %v572, 1.442695
  %v574 = vpow.pop %v573
  %v575 = vadd.f32 %v574, 1.0
  %v576 = vrcp.pop %v575
  %v577 = vmul.f32 1.0, %v576
  %v578 = vmul.f32 %v577, 2.0
  %v579 = vsub.f32 %v578, 1.0
  %v580 = vmul.f32 %v577, %v517
  %582 = vrot.lane.b32.xlu0 %v579, 64
  %v583 = vpop.permute.xlu0 %582
  %v585 = vmul.f32 %v577, %v583
  %587 = vrot.lane.b32.xlu0 %v585, 32
  %v588 = vpop.permute.xlu0 %587
  %v590 = vadd.f32 %v580, %v588
  %v591 = vtanh.pop %v590
  %593 = vrot.lane.b32.xlu0 %v591, 64
  %v594 = vpop.permute.xlu0 %593
  %v596 = vmul.f32 %v577, %v594
  %v597 = vpack.c.bf16 %v596, %v596
  %599 = vrot.lane.b32.xlu0 %v597, 32
  %v600 = vpop.permute.xlu0 %599
  %v602 = vsel %vm235, %v600, 0
  %604 = vmatprep.subr.bf16.mxu0 0
  %605 = vmatpush1.bf16.msra.mxu0 %v231
  %606 = vmatprep.subr.bf16.mxu0 0
  %607 = vmatpush1.bf16.msra.mxu0 %v232
  %608 = vmatprep.subr.bf16.mxu0 0
  %609 = vmatpush1.bf16.msra.mxu0 0
  %610 = vmatprep.subr.bf16.mxu0 0
  %611 = vmatpush1.bf16.msra.mxu0 0
  %612 = vmatprep.subr.bf16.mxu0 0
  %613 = vmatpush1.bf16.msra.mxu0 0
  %614 = vmatprep.subr.bf16.mxu0 0
  %615 = vmatpush1.bf16.msra.mxu0 0
  %616 = vmatprep.subr.bf16.mxu0 0
  %617 = vmatpush1.bf16.msra.mxu0 0
  %618 = vmatprep.subr.bf16.mxu0 0
  %619 = vmatpush1.bf16.msra.mxu0 0
  %620 = vmatprep.subr.bf16.mxu0 0
  %621 = vmatpush1.bf16.msra.mxu0 0
  %622 = vmatprep.subr.bf16.mxu0 0
  %623 = vmatpush1.bf16.msra.mxu0 0
  %624 = vmatprep.subr.bf16.mxu0 0
  %625 = vmatpush1.bf16.msra.mxu0 0
  %626 = vmatprep.subr.bf16.mxu0 0
  %627 = vmatpush1.bf16.msra.mxu0 0
  %628 = vmatprep.subr.bf16.mxu0 0
  %629 = vmatpush1.bf16.msra.mxu0 0
  %630 = vmatprep.subr.bf16.mxu0 0
  %631 = vmatpush1.bf16.msra.mxu0 0
  %632 = vmatprep.subr.bf16.mxu0 0
  %633 = vmatpush1.bf16.msra.mxu0 0
  %634 = vmatprep.subr.bf16.mxu0 0
  %635 = vmatpush1.bf16.msra.mxu0 0
  %636 = vmatprep.mubr.bf16.mxu0 0
  %637 = vmatmul.mubr.bf16.gmra.mrb[0].mxu0 %v602
  %v638 = vpop.f32.mrb[0].mxu0
  %v639 = vadd.f32 0.0, %v638
  %v640 = vpop.f32.mrb[0].mxu0
  %v641 = vpop.f32.mrb[0].mxu0
  %v642 = vpop.f32.mrb[0].mxu0
  %643 = vdwg.mxu0
  %v644 = vadd.f32 %v212, %v639
  %v645 = vxor.u32 %v644, 2147483648
  %v646 = vmul.f32 %v645, 1.442695
  %v647 = vpow.pop %v646
  %v648 = vadd.f32 %v647, 1.0
  %v649 = vrcp.pop %v648
  %v650 = vmul.f32 1.0, %v649
  %v651 = vmul.f32 %v650, 2.0
  %v652 = vsub.f32 %v651, 1.0
  %v653 = vmul.f32 %v650, %v590
  %655 = vrot.lane.b32.xlu0 %v652, 64
  %v656 = vpop.permute.xlu0 %655
  %v658 = vmul.f32 %v650, %v656
  %660 = vrot.lane.b32.xlu0 %v658, 32
  %v661 = vpop.permute.xlu0 %660
  %v663 = vadd.f32 %v653, %v661
  %v664 = vtanh.pop %v663
  %666 = vrot.lane.b32.xlu0 %v664, 64
  %v667 = vpop.permute.xlu0 %666
  %v669 = vmul.f32 %v650, %v667
  %v670 = vpack.c.bf16 %v669, %v669
  %672 = vrot.lane.b32.xlu0 %v670, 32
  %v673 = vpop.permute.xlu0 %672
  %v675 = vsel %vm235, %v673, 0
  %677 = vmatprep.subr.bf16.mxu0 0
  %678 = vmatpush1.bf16.msra.mxu0 %v231
  %679 = vmatprep.subr.bf16.mxu0 0
  %680 = vmatpush1.bf16.msra.mxu0 %v232
  %681 = vmatprep.subr.bf16.mxu0 0
  %682 = vmatpush1.bf16.msra.mxu0 0
  %683 = vmatprep.subr.bf16.mxu0 0
  %684 = vmatpush1.bf16.msra.mxu0 0
  %685 = vmatprep.subr.bf16.mxu0 0
  %686 = vmatpush1.bf16.msra.mxu0 0
  %687 = vmatprep.subr.bf16.mxu0 0
  %688 = vmatpush1.bf16.msra.mxu0 0
  %689 = vmatprep.subr.bf16.mxu0 0
  %690 = vmatpush1.bf16.msra.mxu0 0
  %691 = vmatprep.subr.bf16.mxu0 0
  %692 = vmatpush1.bf16.msra.mxu0 0
  %693 = vmatprep.subr.bf16.mxu0 0
  %694 = vmatpush1.bf16.msra.mxu0 0
  %695 = vmatprep.subr.bf16.mxu0 0
  %696 = vmatpush1.bf16.msra.mxu0 0
  %697 = vmatprep.subr.bf16.mxu0 0
  %698 = vmatpush1.bf16.msra.mxu0 0
  %699 = vmatprep.subr.bf16.mxu0 0
  %700 = vmatpush1.bf16.msra.mxu0 0
  %701 = vmatprep.subr.bf16.mxu0 0
  %702 = vmatpush1.bf16.msra.mxu0 0
  %703 = vmatprep.subr.bf16.mxu0 0
  %704 = vmatpush1.bf16.msra.mxu0 0
  %705 = vmatprep.subr.bf16.mxu0 0
  %706 = vmatpush1.bf16.msra.mxu0 0
  %707 = vmatprep.subr.bf16.mxu0 0
  %708 = vmatpush1.bf16.msra.mxu0 0
  %709 = vmatprep.mubr.bf16.mxu0 0
  %710 = vmatmul.mubr.bf16.gmra.mrb[0].mxu0 %v675
  %v711 = vpop.f32.mrb[0].mxu0
  %v712 = vadd.f32 0.0, %v711
  %v713 = vpop.f32.mrb[0].mxu0
  %v714 = vpop.f32.mrb[0].mxu0
  %v715 = vpop.f32.mrb[0].mxu0
  %716 = vdwg.mxu0
  %v717 = vadd.f32 %v217, %v712
  %v718 = vxor.u32 %v717, 2147483648
  %v719 = vmul.f32 %v718, 1.442695
  %v720 = vpow.pop %v719
  %v721 = vadd.f32 %v720, 1.0
  %v722 = vrcp.pop %v721
  %v723 = vmul.f32 1.0, %v722
  %v724 = vmul.f32 %v723, 2.0
  %v725 = vsub.f32 %v724, 1.0
  %v726 = vmul.f32 %v723, %v663
  %728 = vrot.lane.b32.xlu0 %v725, 64
  %v729 = vpop.permute.xlu0 %728
  %v731 = vmul.f32 %v723, %v729
  %733 = vrot.lane.b32.xlu0 %v731, 32
  %v734 = vpop.permute.xlu0 %733
  %v736 = vadd.f32 %v726, %v734
  %v737 = vtanh.pop %v736
  %739 = vrot.lane.b32.xlu0 %v737, 64
  %v740 = vpop.permute.xlu0 %739
  %v742 = vmul.f32 %v723, %v740
  %v743 = vpack.c.bf16 %v742, %v742
  %745 = vrot.lane.b32.xlu0 %v743, 32
  %v746 = vpop.permute.xlu0 %745
  %v748 = vsel %vm235, %v746, 0
  %750 = vmatprep.subr.bf16.mxu0 0
  %751 = vmatpush1.bf16.msra.mxu0 %v231
  %752 = vmatprep.subr.bf16.mxu0 0
  %753 = vmatpush1.bf16.msra.mxu0 %v232
  %754 = vmatprep.subr.bf16.mxu0 0
  %755 = vmatpush1.bf16.msra.mxu0 0
  %756 = vmatprep.subr.bf16.mxu0 0
  %757 = vmatpush1.bf16.msra.mxu0 0
  %758 = vmatprep.subr.bf16.mxu0 0
  %759 = vmatpush1.bf16.msra.mxu0 0
  %760 = vmatprep.subr.bf16.mxu0 0
  %761 = vmatpush1.bf16.msra.mxu0 0
  %762 = vmatprep.subr.bf16.mxu0 0
  %763 = vmatpush1.bf16.msra.mxu0 0
  %764 = vmatprep.subr.bf16.mxu0 0
  %765 = vmatpush1.bf16.msra.mxu0 0
  %766 = vmatprep.subr.bf16.mxu0 0
  %767 = vmatpush1.bf16.msra.mxu0 0
  %768 = vmatprep.subr.bf16.mxu0 0
  %769 = vmatpush1.bf16.msra.mxu0 0
  %770 = vmatprep.subr.bf16.mxu0 0
  %771 = vmatpush1.bf16.msra.mxu0 0
  %772 = vmatprep.subr.bf16.mxu0 0
  %773 = vmatpush1.bf16.msra.mxu0 0
  %774 = vmatprep.subr.bf16.mxu0 0
  %775 = vmatpush1.bf16.msra.mxu0 0
  %776 = vmatprep.subr.bf16.mxu0 0
  %777 = vmatpush1.bf16.msra.mxu0 0
  %778 = vmatprep.subr.bf16.mxu0 0
  %779 = vmatpush1.bf16.msra.mxu0 0
  %780 = vmatprep.subr.bf16.mxu0 0
  %781 = vmatpush1.bf16.msra.mxu0 0
  %782 = vmatprep.mubr.bf16.mxu0 0
  %783 = vmatmul.mubr.bf16.gmra.mrb[0].mxu0 %v748
  %v784 = vpop.f32.mrb[0].mxu0
  %v785 = vadd.f32 0.0, %v784
  %v786 = vpop.f32.mrb[0].mxu0
  %v787 = vpop.f32.mrb[0].mxu0
  %v788 = vpop.f32.mrb[0].mxu0
  %789 = vdwg.mxu0
  %v790 = vadd.f32 %v220, %v785
  %v791 = vxor.u32 %v790, 2147483648
  %v792 = vmul.f32 %v791, 1.442695
  %v793 = vpow.pop %v792
  %v794 = vadd.f32 %v793, 1.0
  %v795 = vrcp.pop %v794
  %v796 = vmul.f32 1.0, %v795
  %v797 = vmul.f32 %v796, 2.0
  %v798 = vsub.f32 %v797, 1.0
  %v799 = vmul.f32 %v796, %v736
  %801 = vrot.lane.b32.xlu0 %v798, 64
  %v802 = vpop.permute.xlu0 %801
  %v804 = vmul.f32 %v796, %v802
  %806 = vrot.lane.b32.xlu0 %v804, 32
  %v807 = vpop.permute.xlu0 %806
  %v809 = vadd.f32 %v799, %v807
  %v810 = vtanh.pop %v809
  %812 = vrot.lane.b32.xlu0 %v810, 64
  %v813 = vpop.permute.xlu0 %812
  %v815 = vmul.f32 %v796, %v813
  %v816 = vpack.c.bf16 %v815, %v815
  %v817 = vlaneseq
  %v818 = vshrl.u32 %v817, 7
  %v819 = vsub.s32 0, %v818
  %v820 = vrot.slane %v27, %v819
  %822 = vrot.lane.b32.xlu0 %v816, 32
  %v823 = vpop.permute.xlu0 %822
  %v828 = vunpack.c.l.b16 %v22
  %v829 = vunpack.c.l.b16 %v23
  %v830 = vunpack.c.l.b16 %v24
  %v831 = vunpack.c.l.b16 %v25
  %v832 = vpack.c.b16 %v829, %v828
  %v833 = vpack.c.b16 %v831, %v830
  %v837 = vsel %vm235, %v823, 0
  %839 = vmatprep.subr.bf16.mxu0 0
  %840 = vmatpush1.bf16.msra.mxu0 %v832
  %841 = vmatprep.subr.bf16.mxu0 0
  %842 = vmatpush1.bf16.msra.mxu0 %v833
  %843 = vmatprep.subr.bf16.mxu0 0
  %844 = vmatpush1.bf16.msra.mxu0 0
  %845 = vmatprep.subr.bf16.mxu0 0
  %846 = vmatpush1.bf16.msra.mxu0 0
  %847 = vmatprep.subr.bf16.mxu0 0
  %848 = vmatpush1.bf16.msra.mxu0 0
  %849 = vmatprep.subr.bf16.mxu0 0
  %850 = vmatpush1.bf16.msra.mxu0 0
  %851 = vmatprep.subr.bf16.mxu0 0
  %852 = vmatpush1.bf16.msra.mxu0 0
  %853 = vmatprep.subr.bf16.mxu0 0
  %854 = vmatpush1.bf16.msra.mxu0 0
  %855 = vmatprep.subr.bf16.mxu0 0
  %856 = vmatpush1.bf16.msra.mxu0 0
  %857 = vmatprep.subr.bf16.mxu0 0
  %858 = vmatpush1.bf16.msra.mxu0 0
  %859 = vmatprep.subr.bf16.mxu0 0
  %860 = vmatpush1.bf16.msra.mxu0 0
  %861 = vmatprep.subr.bf16.mxu0 0
  %862 = vmatpush1.bf16.msra.mxu0 0
  %863 = vmatprep.subr.bf16.mxu0 0
  %864 = vmatpush1.bf16.msra.mxu0 0
  %865 = vmatprep.subr.bf16.mxu0 0
  %866 = vmatpush1.bf16.msra.mxu0 0
  %867 = vmatprep.subr.bf16.mxu0 0
  %868 = vmatpush1.bf16.msra.mxu0 0
  %869 = vmatprep.subr.bf16.mxu0 0
  %870 = vmatpush1.bf16.msra.mxu0 0
  %871 = vmatprep.mubr.bf16.mxu0 0
  %872 = vmatmul.mubr.bf16.gmra.mrb[0].mxu0 %v837
  %v873 = vpop.f32.mrb[0].mxu0
  %v874 = vadd.f32 %v820, %v873
  %v875 = vpop.f32.mrb[0].mxu0
  %v876 = vpop.f32.mrb[0].mxu0
  %v877 = vpop.f32.mrb[0].mxu0
  %878 = vdwg.mxu0
  %879 = vst [vmem:[%s4] sm:$0xff] %v874
  // Predicated region
  $region18: #{lstm_baseline_forward.1} parent=0 // pred_check
    _
  $region19: #{lstm_baseline_forward.1} parent=0 // pred_check_branch
    %881 = sbr.rel (0) target = $region21
  $region20: #{lstm_baseline_forward.1} parent=0 // pred_region
    _
  $region21: #{lstm_baseline_forward.1} parent=0 // pred_fallthru
    _
  // Predicated region
  $region22: #{lstm_baseline_forward.1} parent=0 // pred_check
    _
  $region23: #{lstm_baseline_forward.1} parent=0 // pred_check_branch
    %883 = sbr.rel (0) target = $region25
  $region24: #{lstm_baseline_forward.1} parent=0 // pred_region
    _
  $region25: #{lstm_baseline_forward.1} parent=0 // pred_fallthru
    _

</llo_original>
